<compile_context>
chip_gen: v7x
topology: tpu7x:2x2x1
jax: 0.10.0
libtpu: 0.0.40
codegen_flags: <defaults>
</compile_context>

<pallas_src>
import functools
import numpy as np
import jax
import jax.numpy as jnp
from jax.experimental import pallas as pl
from jax.experimental.pallas import tpu as pltpu

LEAKY_SLOPE = 0.01  # F.leaky_relu default negative_slope


def _leaky_relu(x):
    return jnp.where(x >= 0, x, LEAKY_SLOPE * x)


def _round_up(x, m):
    return ((x + m - 1) // m) * m


def _vmem_capacity_bytes():
    try:
        info = pltpu.get_tpu_info()
        cap = getattr(info, "vmem_capacity_bytes", None)
        if cap:
            return int(cap)
    except Exception:
        pass
    return 128 * 1024 * 1024  # conservative fallback; budget is capped at 48 MiB anyway


def _choose_tiles(n):
    """(padded N, row tile TM, contraction tile TK), all lane-dense (128 multiples)."""
    np_ = _round_up(max(n, 128), 128)
    if np_ <= 512:                       # whole extent fits one block
        return np_, np_, np_
    np_ = _round_up(n, 512)
    tm = 512
    tk = 1024 if np_ % 1024 == 0 else 512
    return np_, tm, tk


def _plan(n, width):
    """Tiling plan + RHS-residency decision under a generation-aware VMEM budget."""
    cap = _vmem_capacity_bytes()
    budget = min(48 * 1024 * 1024, (cap * 3) // 4)   # 48 MiB cap keeps v7x (64 MiB) safe
    np_, tm, tk = _choose_tiles(n)
    # adj double-buffer + weight double-buffer + f32 acc + output double-buffer
    fixed = (2 * tm * tk * 2) + (2 * width * width * 2) + (tm * width * 4) + (2 * tm * width * 2)
    resident_bytes = 2 * np_ * width * 2             # double-buffered bf16 resident RHS
    resident = (fixed + resident_bytes + (4 << 20)) <= budget
    return np_, tm, tk, resident, budget


def _cp(semantics, budget):
    return pltpu.CompilerParams(
        dimension_semantics=semantics,
        vmem_limit_bytes=int(budget),
    )


# ----------------------------------------------------------------------------
# Kernel A: fused feature transform  XW1_all = X @ concat_m(W1[m])
#   grid = (row tiles, FEA contraction tiles); f32 accumulator.
# ----------------------------------------------------------------------------
def xw_kernel(x_ref, w_ref, out_ref, acc_ref):
    k = pl.program_id(1)

    @pl.when(k == 0)
    def _():
        acc_ref[...] = jnp.zeros_like(acc_ref)

    acc_ref[...] += jnp.dot(x_ref[...], w_ref[...], preferred_element_type=jnp.float32)

    @pl.when(k == pl.num_programs(1) - 1)
    def _():
        out_ref[...] = acc_ref[...].astype(out_ref.dtype)


# ----------------------------------------------------------------------------
# Kernel B: H1W2[m] = leaky_relu(adj[m] @ XW1[m]) @ W2[m]
#   grid = (meta, row tiles, contraction tiles); f32 accumulator; W2 epilogue fused.
#   `resident=True`: xw_ref holds the full (Np, H1P) per-meta slab; slice rows with pl.ds.
# ----------------------------------------------------------------------------
def agg1_kernel(adj_ref, xw_ref, w2_ref, out_ref, acc_ref, *, tk, resident):
    k = pl.program_id(2)

    @pl.when(k == 0)
    def _():
        acc_ref[...] = jnp.zeros_like(acc_ref)

    if resident:
        row = pl.multiple_of(k * tk, tk)
        rhs = xw_ref[pl.ds(row, tk), :]
    else:
        rhs = xw_ref[...]
    acc_ref[...] += jnp.dot(adj_ref[...], rhs, preferred_element_type=jnp.float32)

    @pl.when(k == pl.num_programs(2) - 1)
    def _():
        h1 = _leaky_relu(acc_ref[...])                       # f32 elementwise
        out_ref[...] = jnp.dot(h1.astype(w2_ref.dtype), w2_ref[...],
                               preferred_element_type=jnp.float32).astype(out_ref.dtype)


# ----------------------------------------------------------------------------
# Kernel C: H2[m] = adj[m] @ H1W2[m]   (identity activation)
# ----------------------------------------------------------------------------
def agg2_kernel(adj_ref, h_ref, out_ref, acc_ref, *, tk, resident):
    k = pl.program_id(2)

    @pl.when(k == 0)
    def _():
        acc_ref[...] = jnp.zeros_like(acc_ref)

    if resident:
        row = pl.multiple_of(k * tk, tk)
        rhs = h_ref[pl.ds(row, tk), :]
    else:
        rhs = h_ref[...]
    acc_ref[...] += jnp.dot(adj_ref[...], rhs, preferred_element_type=jnp.float32)

    @pl.when(k == pl.num_programs(2) - 1)
    def _():
        out_ref[...] = acc_ref[...].astype(out_ref.dtype)


# ----------------------------------------------------------------------------
# Kernel D: ChannelAggregation + Classifier, ragged over real (comp, channel) slots only.
#   grid = (row tiles, total channel steps).  Scalar-prefetched tables drive which H2
#   channel / which composition's weights / which output block each step touches, and
#   is_first / is_last gate the accumulator init and the fused classifier+log_softmax.
# ----------------------------------------------------------------------------
def ca_cls_kernel(chan_ref, comp_ref, first_ref, last_ref,
                  h2_ref, wca_ref, bca_ref, wcls_ref, bcls_ref,
                  emb_ref, pred_ref, acc_ref):
    del chan_ref, comp_ref  # used only by the index_maps
    s = pl.program_id(1)

    @pl.when(first_ref[s] == 1)
    def _():
        acc_ref[...] = jnp.zeros_like(acc_ref)

    acc_ref[...] += jnp.dot(h2_ref[...], wca_ref[...], preferred_element_type=jnp.float32)

    @pl.when(last_ref[s] == 1)
    def _():
        emb = _leaky_relu(acc_ref[...] + bca_ref[...])       # bias once per tile, f32
        emb_ref[...] = emb.astype(emb_ref.dtype)             # bf16 store (half writeback)
        logits = jnp.dot(emb.astype(wcls_ref.dtype), wcls_ref[...],
                         preferred_element_type=jnp.float32) + bcls_ref[...]
        m = jnp.max(logits, axis=-1, keepdims=True)
        z = logits - m
        lse = jnp.log(jnp.sum(jnp.exp(z), axis=-1, keepdims=True))
        pred_ref[...] = (z - lse).astype(pred_ref.dtype)


# ----------------------------------------------------------------------------
# MuSDAC glue: parameter packing (padding / stacking / bf16 cast) + 4 pallas_calls.
# ----------------------------------------------------------------------------
def compose(num):
    if num == 1:
        return [(0,)]
    elif num == 2:
        return [(0,), (1,), (0, 1)]
    elif num == 3:
        return [(0,), (1,), (2,), (0, 1), (0, 2), (1, 2), (0, 1, 2)]
    raise AssertionError("Not supporting meta-path num >= 4.")


def init_musdac_params(key, fea_dim, hid1_dim, hid2_dim, emb_dim, cls_dim,
                       n_meta, cu="cu"):
    comps = compose(n_meta)
    params = {"gc1_w": [], "gc2_w": [], "ca_w": [], "ca_b": [],
              "cls_w": [], "cls_b": [], "comps": comps}
    keys = jax.random.split(key, 2 * n_meta + 2 * len(comps))
    ki = 0
    for _ in range(n_meta):
        params["gc1_w"].append(
            0.1 * jax.random.normal(keys[ki], (fea_dim, hid1_dim), jnp.float32)); ki += 1
        params["gc2_w"].append(
            0.1 * jax.random.normal(keys[ki], (hid1_dim, hid2_dim), jnp.float32)); ki += 1
    for comp in comps:
        c = len(comp)
        params["ca_w"].append(
            0.1 * jax.random.normal(keys[ki], (c * hid2_dim, emb_dim), jnp.float32)); ki += 1
        params["ca_b"].append(jnp.zeros((1, emb_dim), jnp.float32))
        params["cls_w"].append(
            0.1 * jax.random.normal(keys[ki], (emb_dim, cls_dim), jnp.float32)); ki += 1
        params["cls_b"].append(jnp.zeros((1, cls_dim), jnp.float32))
    return params


def musdac_forward(features, adjs, params):
    n_meta = len(params["gc1_w"])
    assert n_meta == len(adjs), (
        "Need {} adjacency matrices, but {} given.".format(n_meta, len(adjs)))
    comps = params["comps"]
    n_comp = len(comps)

    N, FEA = features.shape
    HID1 = params["gc1_w"][0].shape[1]
    HID2 = params["gc2_w"][0].shape[1]
    EMB = params["ca_w"][0].shape[1]
    CLS = params["cls_w"][0].shape[1]

    H1P = _round_up(HID1, 128)
    H2P = _round_up(HID2, 128)
    EMBP = _round_up(EMB, 128)
    CLSP = _round_up(CLS, 128)
    W1TOT = n_meta * H1P

    width = max(H1P, H2P)
    Np, TM, TK, resident, budget = _plan(N, width)

    # FEA contraction tiling for kernel A (padded to 128; tiled when large).
    if FEA <= 2048:
        FEAP = _round_up(FEA, 128)
        TKF = FEAP
    else:
        FEAP = _round_up(FEA, 512)
        TKF = 512

    # ---- pack & pad operands (zero padding leaves real outputs exact) ----
    # TODO(synk): adj kept in bf16 for HBM-bandwidth reasons; use f32 if accuracy-critical.
    x_p = jnp.pad(features.astype(jnp.bfloat16), ((0, Np - N), (0, FEAP - FEA)))
    adj_p = jnp.pad(jnp.stack([a.astype(jnp.bfloat16) for a in adjs]),
                    ((0, 0), (0, Np - N), (0, Np - N)))
    w1_fused = jnp.concatenate(
        [jnp.pad(w.astype(jnp.bfloat16), ((0, FEAP - FEA), (0, H1P - HID1)))
         for w in params["gc1_w"]], axis=1)                  # (FEAP, n_meta*H1P)
    w2_p = jnp.stack([jnp.pad(w.astype(jnp.bfloat16),
                              ((0, H1P - HID1), (0, H2P - HID2)))
                      for w in params["gc2_w"]])             # (n_meta, H1P, H2P)

    # Ragged (comp, channel-slot) step tables + per-step CA weight slabs.
    chan_l, comp_l, first_l, last_l, wca_l = [], [], [], [], []
    for k, comp in enumerate(comps):
        w = params["ca_w"][k].astype(jnp.bfloat16)           # (len(comp)*HID2, EMB)
        for j, ch in enumerate(comp):
            chan_l.append(ch)
            comp_l.append(k)
            first_l.append(1 if j == 0 else 0)
            last_l.append(1 if j == len(comp) - 1 else 0)
            wca_l.append(jnp.pad(w[j * HID2:(j + 1) * HID2, :],
                                 ((0, H2P - HID2), (0, EMBP - EMB))))
    TOT = len(chan_l)
    wca_p = jnp.stack(wca_l)                                 # (TOT, H2P, EMBP)
    chan_tbl = jnp.asarray(np.asarray(chan_l, np.int32))
    comp_tbl = jnp.asarray(np.asarray(comp_l, np.int32))
    first_tbl = jnp.asarray(np.asarray(first_l, np.int32))
    last_tbl = jnp.asarray(np.asarray(last_l, np.int32))

    bca_p = jnp.stack([jnp.pad(params["ca_b"][k].astype(jnp.float32).reshape(1, EMB),
                               ((0, 0), (0, EMBP - EMB)))
                       for k in range(n_comp)])              # (n_comp, 1, EMBP)
    wcls_p = jnp.stack([jnp.pad(params["cls_w"][k].astype(jnp.bfloat16),
                                ((0, EMBP - EMB), (0, CLSP - CLS)))
                        for k in range(n_comp)])             # (n_comp, EMBP, CLSP)
    # padded classifier lanes get -1e30 bias so log_softmax ignores them
    bcls_p = jnp.stack([jnp.pad(params["cls_b"][k].astype(jnp.float32).reshape(1, CLS),
                                ((0, 0), (0, CLSP - CLS)), constant_values=-1e30)
                        for k in range(n_comp)])             # (n_comp, 1, CLSP)

    # ---- Kernel A: XW1_all = X @ concat(W1) (X streamed once, wide MXU output) ----
    xw1 = pl.pallas_call(
        xw_kernel,
        grid_spec=pltpu.PrefetchScalarGridSpec(
            num_scalar_prefetch=0,
            grid=(Np // TM, FEAP // TKF),
            in_specs=[
                pl.BlockSpec((TM, TKF), lambda i, k: (i, k)),
                pl.BlockSpec((TKF, W1TOT), lambda i, k: (k, 0)),
            ],
            out_specs=pl.BlockSpec((TM, W1TOT), lambda i, k: (i, 0)),
            scratch_shapes=[pltpu.VMEM((TM, W1TOT), jnp.float32)],
        ),
        out_shape=jax.ShapeDtypeStruct((Np, W1TOT), jnp.bfloat16),
        compiler_params=_cp(("parallel", "arbitrary"), budget),
    )(x_p, w1_fused)

    # ---- Kernel B: H1W2[m] = leaky_relu(adj[m] @ XW1[m]) @ W2[m] ----
    if resident:
        xw_spec = pl.BlockSpec((Np, H1P), lambda m, i, k: (0, m))       # per-m VMEM resident
    else:
        xw_spec = pl.BlockSpec((TK, H1P), lambda m, i, k: (k, m))       # streamed fallback
    h1w2 = pl.pallas_call(
        functools.partial(agg1_kernel, tk=TK, resident=resident),
        grid_spec=pltpu.PrefetchScalarGridSpec(
            num_scalar_prefetch=0,
            grid=(n_meta, Np // TM, Np // TK),
            in_specs=[
                pl.BlockSpec((None, TM, TK), lambda m, i, k: (m, i, k)),
                xw_spec,
                pl.BlockSpec((None, H1P, H2P), lambda m, i, k: (m, 0, 0)),
            ],
            out_specs=pl.BlockSpec((None, TM, H2P), lambda m, i, k: (m, i, 0)),
            scratch_shapes=[pltpu.VMEM((TM, H1P), jnp.float32)],
        ),
        out_shape=jax.ShapeDtypeStruct((n_meta, Np, H2P), jnp.bfloat16),
        compiler_params=_cp(("parallel", "parallel", "arbitrary"), budget),
    )(adj_p, xw1, w2_p)

    # ---- Kernel C: H2[m] = adj[m] @ H1W2[m] ----
    if resident:
        h_spec = pl.BlockSpec((None, Np, H2P), lambda m, i, k: (m, 0, 0))
    else:
        h_spec = pl.BlockSpec((None, TK, H2P), lambda m, i, k: (m, k, 0))
    h2 = pl.pallas_call(
        functools.partial(agg2_kernel, tk=TK, resident=resident),
        grid_spec=pltpu.PrefetchScalarGridSpec(
            num_scalar_prefetch=0,
            grid=(n_meta, Np // TM, Np // TK),
            in_specs=[
                pl.BlockSpec((None, TM, TK), lambda m, i, k: (m, i, k)),
                h_spec,
            ],
            out_specs=pl.BlockSpec((None, TM, H2P), lambda m, i, k: (m, i, 0)),
            scratch_shapes=[pltpu.VMEM((TM, H2P), jnp.float32)],
        ),
        out_shape=jax.ShapeDtypeStruct((n_meta, Np, H2P), jnp.bfloat16),
        compiler_params=_cp(("parallel", "parallel", "arbitrary"), budget),
    )(adj_p, h1w2)

    # ---- Kernel D: ragged ChannelAggregation + Classifier for all compositions ----
    emb_p, pred_p = pl.pallas_call(
        ca_cls_kernel,
        grid_spec=pltpu.PrefetchScalarGridSpec(
            num_scalar_prefetch=4,
            grid=(Np // TM, TOT),
            in_specs=[
                pl.BlockSpec((None, TM, H2P),
                             lambda i, s, chan, comp, first, last: (chan[s], i, 0)),
                pl.BlockSpec((None, H2P, EMBP),
                             lambda i, s, chan, comp, first, last: (s, 0, 0)),
                pl.BlockSpec((None, 1, EMBP),
                             lambda i, s, chan, comp, first, last: (comp[s], 0, 0)),
                pl.BlockSpec((None, EMBP, CLSP),
                             lambda i, s, chan, comp, first, last: (comp[s], 0, 0)),
                pl.BlockSpec((None, 1, CLSP),
                             lambda i, s, chan, comp, first, last: (comp[s], 0, 0)),
            ],
            out_specs=(
                pl.BlockSpec((None, TM, EMBP),
                             lambda i, s, chan, comp, first, last: (comp[s], i, 0)),
                pl.BlockSpec((None, TM, CLSP),
                             lambda i, s, chan, comp, first, last: (comp[s], i, 0)),
            ),
            scratch_shapes=[pltpu.VMEM((TM, EMBP), jnp.float32)],
        ),
        out_shape=(
            jax.ShapeDtypeStruct((n_comp, Np, EMBP), jnp.bfloat16),
            jax.ShapeDtypeStruct((n_comp, Np, CLSP), jnp.float32),
        ),
        compiler_params=_cp(("parallel", "arbitrary"), budget),
    )(chan_tbl, comp_tbl, first_tbl, last_tbl, h2, wca_p, bca_p, wcls_p, bcls_p)

    embeddings = [emb_p[k, :N, :EMB].astype(jnp.float32) for k in range(n_comp)]
    predictions = [pred_p[k, :N, :CLS] for k in range(n_comp)]
    return embeddings, predictions


# ----------------------------------------------------------------------------
# Pure-JAX reference (f32) for a correctness sanity check.
# ----------------------------------------------------------------------------
def musdac_reference(features, adjs, params):
    n_meta = len(params["gc1_w"])
    hidden2s = []
    for i in range(n_meta):
        h1 = _leaky_relu(adjs[i] @ (features @ params["gc1_w"][i]))
        hidden2s.append(adjs[i] @ (h1 @ params["gc2_w"][i]))
    embs, preds = [], []
    for k, comp in enumerate(params["comps"]):
        xcat = jnp.concatenate([hidden2s[c] for c in comp], axis=1)
        emb = _leaky_relu(xcat @ params["ca_w"][k] + params["ca_b"][k])
        logits = emb @ params["cls_w"][k] + params["cls_b"][k]
        embs.append(emb)
        preds.append(jax.nn.log_softmax(logits, axis=-1))
    return embs, preds


if __name__ == "__main__":
    # Small, TPU-friendly sizes.
    N = 16          # nodes
    FEA = 32        # fea_dim
    HID1 = 32       # hid1_dim
    HID2 = 32       # hid2_dim
    EMB = 32        # emb_dim
    CLS = 4         # cls_dim
    N_META = 2      # -> comps (cu mode): [(0,), (1,), (0, 1)]

    key = jax.random.PRNGKey(0)
    k_feat, k_adj, k_par = jax.random.split(key, 3)

    features = jax.random.normal(k_feat, (N, FEA), jnp.float32)

    # Deterministic row-normalized adjacencies with self-loops, one per meta-path.
    adjs = []
    adj_keys = jax.random.split(k_adj, N_META)
    for i in range(N_META):
        a = (jax.random.uniform(adj_keys[i], (N, N)) < 0.3).astype(jnp.float32)
        a = jnp.maximum(a, a.T) + jnp.eye(N, dtype=jnp.float32)
        a = a / jnp.sum(a, axis=1, keepdims=True)
        adjs.append(a)

    params = init_musdac_params(k_par, FEA, HID1, HID2, EMB, CLS, N_META, cu="cu")

    embeddings, predictions = musdac_forward(features, adjs, params)
    for e in embeddings:
        jax.block_until_ready(e)
    for p in predictions:
        jax.block_until_ready(p)

    assert len(embeddings) == 2 * N_META - 1
    assert all(e.shape == (N, EMB) for e in embeddings)
    assert all(p.shape == (N, CLS) for p in predictions)

    # Sanity check against the f32 reference (bf16 matmuls -> loose tolerance).
    ref_embs, ref_preds = musdac_reference(features, adjs, params)
    for e, er in zip(embeddings, ref_embs):
        np.testing.assert_allclose(np.asarray(e), np.asarray(er), atol=5e-2, rtol=0)
    for p, pr in zip(predictions, ref_preds):
        np.testing.assert_allclose(np.asarray(p), np.asarray(pr), atol=5e-2, rtol=0)

    print("KERNEL_OK")
</pallas_src>

<mosaic_0001>
module attributes {stable_mosaic.version = 11 : i64} {
  func.func @xw_kernel(%arg0: i32, %arg1: i32, %arg2: memref<128x128xbf16, #tpu.memory_space<vmem>>, %arg3: memref<128x256xbf16, #tpu.memory_space<vmem>>, %arg4: memref<128x256xbf16, #tpu.memory_space<vmem>>, %arg5: memref<128x256xf32, #tpu.memory_space<vmem>>) attributes {dimension_semantics = [#tpu.dimension_semantics<parallel>, #tpu.dimension_semantics<arbitrary>], iteration_bounds = array<i64: 1, 1>, scalar_prefetch = 0 : i64, scratch_operands = 1 : i64, tpu.core_type = #tpu.core_type<tc>, window_params = [{transform_indices = @transform_0, window_bounds = array<i64: 128, 128>}, {transform_indices = @transform_1, window_bounds = array<i64: 128, 256>}, {transform_indices = @transform_2, window_bounds = array<i64: 128, 256>}]} {
    %c0_i32 = arith.constant 0 : i32
    %0 = arith.cmpi eq, %arg1, %c0_i32 : i32
    %1 = arith.extui %0 : i1 to i32
    %c0_i32_0 = arith.constant 0 : i32
    %2 = arith.cmpi ne, %1, %c0_i32_0 : i32
    scf.if %2 {
      %cst_10 = arith.constant 0.000000e+00 : f32
      %12 = vector.broadcast %cst_10 : f32 to vector<128x256xf32>
      %c0_11 = arith.constant 0 : index
      %c0_12 = arith.constant 0 : index
      %13 = vector.load %arg5[%c0_11, %c0_12] : memref<128x256xf32, #tpu.memory_space<vmem>>, vector<128x256xf32>
      tpu.vector_store %arg5[%c0_11, %c0_12], %12 {strides = array<i32>} : memref<128x256xf32, #tpu.memory_space<vmem>>, vector<128x256xf32>,
    } else {
    }
    %c0 = arith.constant 0 : index
    %c0_1 = arith.constant 0 : index
    %3 = vector.load %arg5[%c0, %c0_1] : memref<128x256xf32, #tpu.memory_space<vmem>>, vector<128x256xf32>
    %c0_2 = arith.constant 0 : index
    %c0_3 = arith.constant 0 : index
    %4 = vector.load %arg2[%c0_2, %c0_3] : memref<128x128xbf16, #tpu.memory_space<vmem>>, vector<128x128xbf16>
    %c0_4 = arith.constant 0 : index
    %c0_5 = arith.constant 0 : index
    %5 = vector.load %arg3[%c0_4, %c0_5] : memref<128x256xbf16, #tpu.memory_space<vmem>>, vector<128x256xbf16>
    %cst = arith.constant dense<0.000000e+00> : vector<128x256xf32>
    %6 = tpu.matmul %4, %5, %cst {dimension_numbers = #tpu.dot_dimension_numbers<[1], [0], [0], [1], [0, 0, 1, 1], [], []>} : vector<128x128xbf16>, vector<128x256xbf16>, vector<128x256xf32> -> vector<128x256xf32>
    %7 = arith.addf %3, %6 : vector<128x256xf32>
    %c0_6 = arith.constant 0 : index
    %c0_7 = arith.constant 0 : index
    %8 = vector.load %arg5[%c0_6, %c0_7] : memref<128x256xf32, #tpu.memory_space<vmem>>, vector<128x256xf32>
    tpu.vector_store %arg5[%c0_6, %c0_7], %7 {strides = array<i32>} : memref<128x256xf32, #tpu.memory_space<vmem>>, vector<128x256xf32>,
    %c0_i32_8 = arith.constant 0 : i32
    %9 = arith.cmpi eq, %arg1, %c0_i32_8 : i32
    %10 = arith.extui %9 : i1 to i32
    %c0_i32_9 = arith.constant 0 : i32
    %11 = arith.cmpi ne, %10, %c0_i32_9 : i32
    scf.if %11 {
      %c0_10 = arith.constant 0 : index
      %c0_11 = arith.constant 0 : index
      %12 = vector.load %arg5[%c0_10, %c0_11] : memref<128x256xf32, #tpu.memory_space<vmem>>, vector<128x256xf32>
      %13 = arith.truncf %12 : vector<128x256xf32> to vector<128x256xbf16>
      %c0_12 = arith.constant 0 : index
      %c0_13 = arith.constant 0 : index
      %14 = vector.load %arg4[%c0_12, %c0_13] : memref<128x256xbf16, #tpu.memory_space<vmem>>, vector<128x256xbf16>
      tpu.vector_store %arg4[%c0_12, %c0_13], %13 {strides = array<i32>} : memref<128x256xbf16, #tpu.memory_space<vmem>>, vector<128x256xbf16>,
    } else {
    }
    return
  }
  func.func @transform_0(%arg0: i32, %arg1: i32) -> (i32, i32) {
    %c0_i32 = arith.constant 0 : i32
    return %arg0, %arg1 : i32, i32
  }
  func.func @transform_1(%arg0: i32, %arg1: i32) -> (i32, i32) {
    %c0_i32 = arith.constant 0 : i32
    %c0_i32_0 = arith.constant 0 : i32
    return %arg1, %c0_i32 : i32, i32
  }
  func.func @transform_2(%arg0: i32, %arg1: i32) -> (i32, i32) {
    %c0_i32 = arith.constant 0 : i32
    %c0_i32_0 = arith.constant 0 : i32
    return %arg0, %c0_i32 : i32, i32
  }
}

</mosaic_0001>

<llo_original>
// kernel: tpu_custom_call.1
$region0: #{tpu_custom_call.1}
  #allocation0 [shape = 'u32[]', space=smem, size = 0x4, offset = 0x4, fixed_abs, tag = 'smem constant byte address 0x4 - core index']
  #allocation1 [shape = 'u32[144,128]{1,0:T(1,128)}', space=vmem, size = 0x12000, scoped, tag = 'internal scratch']
  #allocation2 [shape = 'f32[128,256]{1,0:T(8,128)}', space=vmem, size = 0x20000, scoped, tag = 'scratch operand']
  %s0 = inlined_call_operand.hbm [shape: bf16[128,128], index: 0, kind: input, shape index: {}]
  %s1 = inlined_call_operand.hbm [shape: bf16[128,256], index: 1, kind: input, shape index: {}]
  %s2 = inlined_call_operand.hbm [shape: bf16[128,256], index: 2, kind: output, shape index: {}]
  %s3 = sld [smem:[#allocation0]]
  $region34: #{tpu_custom_call.1} parent=0
    _
  %s5 = ssub.s32 1, %s3
  %s6 = scalar_select 0, %s5, %s3
  $region1: #{tpu_custom_call.1} parent=0
    #allocation3 [shape = 'u8[32768]{0}', space=vmem, size = 0x8000, scoped, tag = 'input window, operand 0, single buffered']
    #allocation4 [shape = 's32[1]{0}', space=sflag, size = 0x4, scoped, tag = 'scoped memory for tpu_custom_call.1']
    #allocation5 [shape = 's32[1]{0}', space=sflag, size = 0x4, scoped, tag = 'scoped memory for tpu_custom_call.1']
    #allocation6 [shape = 'u8[65536]{0}', space=vmem, size = 0x10000, scoped, tag = 'input window, operand 1, single buffered']
    #allocation7 [shape = 's32[1]{0}', space=sflag, size = 0x4, scoped, tag = 'scoped memory for tpu_custom_call.1']
    #allocation8 [shape = 'u8[65536]{0}', space=vmem, size = 0x10000, scoped, tag = 'output window, operand 0, single buffered']
    %7 = vsyncpa [#allocation4], 0
    %8 = vsyncpa [#allocation7], 0
    %9 = vsyncpa [#allocation5], 0
    // Predicated region
    $region2: #{tpu_custom_call.1} parent=1 // pred_check
      _
    $region3: #{tpu_custom_call.1} parent=1 // pred_check_branch
      %11 = sbr.rel (0) target = $region5
    $region4: #{tpu_custom_call.1} parent=1 // pred_region
      %s13 = ssub.s32 1024, 1024
      %14 = vsyncadd [#allocation4], %s13
      %s15 = sshll.u32 [#allocation3], 4
      %s16 = int_to_ptr.vmem [resolvable:$true] %s15
      %21 = dma.hbm_to_vmem [thread:$0]  %s0, 1024, %s16, [#allocation4], 64, 64, 4
    $region5: #{tpu_custom_call.1} parent=1 // pred_fallthru
      _
    // Predicated region
    $region6: #{tpu_custom_call.1} parent=1 // pred_check
      _
    $region7: #{tpu_custom_call.1} parent=1 // pred_check_branch
      %23 = sbr.rel (0) target = $region9
    $region8: #{tpu_custom_call.1} parent=1 // pred_region
      %s25 = ssub.s32 2048, 2048
      %26 = vsyncadd [#allocation7], %s25
      %s27 = sshll.u32 [#allocation6], 4
      %s28 = int_to_ptr.vmem [resolvable:$true] %s27
      %33 = dma.hbm_to_vmem [thread:$0]  %s1, 2048, %s28, [#allocation7], 128, 128, 8
    $region9: #{tpu_custom_call.1} parent=1 // pred_fallthru
      _
    // Predicated region
    $region10: #{tpu_custom_call.1} parent=1 // pred_check
      _
    $region11: #{tpu_custom_call.1} parent=1 // pred_check_branch
      %35 = sbr.rel (0) target = $region13
    $region12: #{tpu_custom_call.1} parent=1 // pred_region
      %36 = dma.done [#allocation4], 1024
    $region13: #{tpu_custom_call.1} parent=1 // pred_fallthru
      _
    // Predicated region
    $region14: #{tpu_custom_call.1} parent=1 // pred_check
      _
    $region15: #{tpu_custom_call.1} parent=1 // pred_check_branch
      %38 = sbr.rel (0) target = $region17
    $region16: #{tpu_custom_call.1} parent=1 // pred_region
      %39 = dma.done [#allocation7], 2048
    $region17: #{tpu_custom_call.1} parent=1 // pred_fallthru
      _
    %p41 = scmp.eq.s32.totalorder 0, 0
    // Predicated region
    $region18: #{tpu_custom_call.1} parent=1 // pred_check
      %p42 = pneg %p41
    $region19: #{tpu_custom_call.1} parent=1 // pred_check_branch
      %44 = sbr.rel (%p42) target = $region21
    $region20: #{tpu_custom_call.1} parent=1 // pred_region
      %45 = vst [vmem:[#allocation2] sm:$0xff] 0.0
      %46 = vst [vmem:[#allocation2 + $0x8] sm:$0xff] 0.0
      %47 = vst [vmem:[#allocation2 + $0x10] sm:$0xff] 0.0
      %48 = vst [vmem:[#allocation2 + $0x18] sm:$0xff] 0.0
      %49 = vst [vmem:[#allocation2 + $0x20] sm:$0xff] 0.0
      %50 = vst [vmem:[#allocation2 + $0x28] sm:$0xff] 0.0
      %51 = vst [vmem:[#allocation2 + $0x30] sm:$0xff] 0.0
      %52 = vst [vmem:[#allocation2 + $0x38] sm:$0xff] 0.0
      %53 = vst [vmem:[#allocation2 + $0x40] sm:$0xff] 0.0
      %54 = vst [vmem:[#allocation2 + $0x48] sm:$0xff] 0.0
      %55 = vst [vmem:[#allocation2 + $0x50] sm:$0xff] 0.0
      %56 = vst [vmem:[#allocation2 + $0x58] sm:$0xff] 0.0
      %57 = vst [vmem:[#allocation2 + $0x60] sm:$0xff] 0.0
      %58 = vst [vmem:[#allocation2 + $0x68] sm:$0xff] 0.0
      %59 = vst [vmem:[#allocation2 + $0x70] sm:$0xff] 0.0
      %60 = vst [vmem:[#allocation2 + $0x78] sm:$0xff] 0.0
      %61 = vst [vmem:[#allocation2 + $0x80] sm:$0xff] 0.0
      %62 = vst [vmem:[#allocation2 + $0x88] sm:$0xff] 0.0
      %63 = vst [vmem:[#allocation2 + $0x90] sm:$0xff] 0.0
      %64 = vst [vmem:[#allocation2 + $0x98] sm:$0xff] 0.0
      %65 = vst [vmem:[#allocation2 + $0xa0] sm:$0xff] 0.0
      %66 = vst [vmem:[#allocation2 + $0xa8] sm:$0xff] 0.0
      %67 = vst [vmem:[#allocation2 + $0xb0] sm:$0xff] 0.0
      %68 = vst [vmem:[#allocation2 + $0xb8] sm:$0xff] 0.0
      %69 = vst [vmem:[#allocation2 + $0xc0] sm:$0xff] 0.0
      %70 = vst [vmem:[#allocation2 + $0xc8] sm:$0xff] 0.0
      %71 = vst [vmem:[#allocation2 + $0xd0] sm:$0xff] 0.0
      %72 = vst [vmem:[#allocation2 + $0xd8] sm:$0xff] 0.0
      %73 = vst [vmem:[#allocation2 + $0xe0] sm:$0xff] 0.0
      %74 = vst [vmem:[#allocation2 + $0xe8] sm:$0xff] 0.0
      %75 = vst [vmem:[#allocation2 + $0xf0] sm:$0xff] 0.0
      %76 = vst [vmem:[#allocation2 + $0xf8] sm:$0xff] 0.0
    $region21: #{tpu_custom_call.1} parent=1 // pred_fallthru
      _
    %v77 = vld [vmem:[#allocation2] sm:$0xff]
    %v78 = vld [vmem:[#allocation2 + $0x8] sm:$0xff]
    %v79 = vld [vmem:[#allocation2 + $0x10] sm:$0xff]
    %v80 = vld [vmem:[#allocation2 + $0x18] sm:$0xff]
    %v81 = vld [vmem:[#allocation2 + $0x20] sm:$0xff]
    %v82 = vld [vmem:[#allocation2 + $0x28] sm:$0xff]
    %v83 = vld [vmem:[#allocation2 + $0x30] sm:$0xff]
    %v84 = vld [vmem:[#allocation2 + $0x38] sm:$0xff]
    %v85 = vld [vmem:[#allocation2 + $0x40] sm:$0xff]
    %v86 = vld [vmem:[#allocation2 + $0x48] sm:$0xff]
    %v87 = vld [vmem:[#allocation2 + $0x50] sm:$0xff]
    %v88 = vld [vmem:[#allocation2 + $0x58] sm:$0xff]
    %v89 = vld [vmem:[#allocation2 + $0x60] sm:$0xff]
    %v90 = vld [vmem:[#allocation2 + $0x68] sm:$0xff]
    %v91 = vld [vmem:[#allocation2 + $0x70] sm:$0xff]
    %v92 = vld [vmem:[#allocation2 + $0x78] sm:$0xff]
    %v93 = vld [vmem:[#allocation2 + $0x80] sm:$0xff]
    %v94 = vld [vmem:[#allocation2 + $0x88] sm:$0xff]
    %v95 = vld [vmem:[#allocation2 + $0x90] sm:$0xff]
    %v96 = vld [vmem:[#allocation2 + $0x98] sm:$0xff]
    %v97 = vld [vmem:[#allocation2 + $0xa0] sm:$0xff]
    %v98 = vld [vmem:[#allocation2 + $0xa8] sm:$0xff]
    %v99 = vld [vmem:[#allocation2 + $0xb0] sm:$0xff]
    %v100 = vld [vmem:[#allocation2 + $0xb8] sm:$0xff]
    %v101 = vld [vmem:[#allocation2 + $0xc0] sm:$0xff]
    %v102 = vld [vmem:[#allocation2 + $0xc8] sm:$0xff]
    %v103 = vld [vmem:[#allocation2 + $0xd0] sm:$0xff]
    %v104 = vld [vmem:[#allocation2 + $0xd8] sm:$0xff]
    %v105 = vld [vmem:[#allocation2 + $0xe0] sm:$0xff]
    %v106 = vld [vmem:[#allocation2 + $0xe8] sm:$0xff]
    %v107 = vld [vmem:[#allocation2 + $0xf0] sm:$0xff]
    %v108 = vld [vmem:[#allocation2 + $0xf8] sm:$0xff]
    %v109 = vld [vmem:[#allocation3] sm:$0xf]
    %v110 = vld [vmem:[#allocation3 + $0x4] sm:$0xf]
    %v111 = vld [vmem:[#allocation3 + $0x8] sm:$0xf]
    %v112 = vld [vmem:[#allocation3 + $0xc] sm:$0xf]
    %v113 = vld [vmem:[#allocation3 + $0x10] sm:$0xf]
    %v114 = vld [vmem:[#allocation3 + $0x14] sm:$0xf]
    %v115 = vld [vmem:[#allocation3 + $0x18] sm:$0xf]
    %v116 = vld [vmem:[#allocation3 + $0x1c] sm:$0xf]
    %v117 = vld [vmem:[#allocation3 + $0x20] sm:$0xf]
    %v118 = vld [vmem:[#allocation3 + $0x24] sm:$0xf]
    %v119 = vld [vmem:[#allocation3 + $0x28] sm:$0xf]
    %v120 = vld [vmem:[#allocation3 + $0x2c] sm:$0xf]
    %v121 = vld [vmem:[#allocation3 + $0x30] sm:$0xf]
    %v122 = vld [vmem:[#allocation3 + $0x34] sm:$0xf]
    %v123 = vld [vmem:[#allocation3 + $0x38] sm:$0xf]
    %v124 = vld [vmem:[#allocation3 + $0x3c] sm:$0xf]
    %v125 = vld [vmem:[#allocation6] sm:$0xff]
    %v126 = vld [vmem:[#allocation6 + $0x8] sm:$0xff]
    %v127 = vld [vmem:[#allocation6 + $0x10] sm:$0xff]
    %v128 = vld [vmem:[#allocation6 + $0x18] sm:$0xff]
    %v129 = vld [vmem:[#allocation6 + $0x20] sm:$0xff]
    %v130 = vld [vmem:[#allocation6 + $0x28] sm:$0xff]
    %v131 = vld [vmem:[#allocation6 + $0x30] sm:$0xff]
    %v132 = vld [vmem:[#allocation6 + $0x38] sm:$0xff]
    %v133 = vld [vmem:[#allocation6 + $0x40] sm:$0xff]
    %v134 = vld [vmem:[#allocation6 + $0x48] sm:$0xff]
    %v135 = vld [vmem:[#allocation6 + $0x50] sm:$0xff]
    %v136 = vld [vmem:[#allocation6 + $0x58] sm:$0xff]
    %v137 = vld [vmem:[#allocation6 + $0x60] sm:$0xff]
    %v138 = vld [vmem:[#allocation6 + $0x68] sm:$0xff]
    %v139 = vld [vmem:[#allocation6 + $0x70] sm:$0xff]
    %v140 = vld [vmem:[#allocation6 + $0x78] sm:$0xff]
    %v157 = vunpack.c.l.b16 %v109
    %v158 = vunpack.c.l.b16 %v110
    %v159 = vunpack.c.l.b16 %v111
    %v160 = vunpack.c.l.b16 %v112
    %v161 = vunpack.c.l.b16 %v113
    %v162 = vunpack.c.l.b16 %v114
    %v163 = vunpack.c.l.b16 %v115
    %v164 = vunpack.c.l.b16 %v116
    %v165 = vunpack.c.l.b16 %v117
    %v166 = vunpack.c.l.b16 %v118
    %v167 = vunpack.c.l.b16 %v119
    %v168 = vunpack.c.l.b16 %v120
    %v169 = vunpack.c.l.b16 %v121
    %v170 = vunpack.c.l.b16 %v122
    %v171 = vunpack.c.l.b16 %v123
    %v172 = vunpack.c.l.b16 %v124
    %v173 = vpack.c.b16 %v158, %v157
    %v174 = vpack.c.b16 %v160, %v159
    %v175 = vpack.c.b16 %v162, %v161
    %v176 = vpack.c.b16 %v164, %v163
    %v177 = vpack.c.b16 %v166, %v165
    %v178 = vpack.c.b16 %v168, %v167
    %v179 = vpack.c.b16 %v170, %v169
    %v180 = vpack.c.b16 %v172, %v171
    %v205 = vunpack.c.l.b16 %v125
    %v206 = vunpack.c.h.b16 %v125
    %v207 = vunpack.c.l.b16 %v126
    %v208 = vunpack.c.h.b16 %v126
    %v209 = vunpack.c.l.b16 %v127
    %v210 = vunpack.c.h.b16 %v127
    %v211 = vunpack.c.l.b16 %v128
    %v212 = vunpack.c.h.b16 %v128
    %v213 = vunpack.c.l.b16 %v129
    %v214 = vunpack.c.h.b16 %v129
    %v215 = vunpack.c.l.b16 %v130
    %v216 = vunpack.c.h.b16 %v130
    %v217 = vunpack.c.l.b16 %v131
    %v218 = vunpack.c.h.b16 %v131
    %v219 = vunpack.c.l.b16 %v132
    %v220 = vunpack.c.h.b16 %v132
    %v221 = vunpack.c.l.b16 %v133
    %v222 = vunpack.c.h.b16 %v133
    %v223 = vunpack.c.l.b16 %v134
    %v224 = vunpack.c.h.b16 %v134
    %v225 = vunpack.c.l.b16 %v135
    %v226 = vunpack.c.h.b16 %v135
    %v227 = vunpack.c.l.b16 %v136
    %v228 = vunpack.c.h.b16 %v136
    %v229 = vunpack.c.l.b16 %v137
    %v230 = vunpack.c.h.b16 %v137
    %v231 = vunpack.c.l.b16 %v138
    %v232 = vunpack.c.h.b16 %v138
    %v233 = vunpack.c.l.b16 %v139
    %v234 = vunpack.c.h.b16 %v139
    %v235 = vunpack.c.l.b16 %v140
    %v236 = vunpack.c.h.b16 %v140
    %v237 = vpack.c.b16 %v207, %v205
    %v238 = vpack.c.b16 %v208, %v206
    %v239 = vpack.c.b16 %v211, %v209
    %v240 = vpack.c.b16 %v212, %v210
    %v241 = vpack.c.b16 %v215, %v213
    %v242 = vpack.c.b16 %v216, %v214
    %v243 = vpack.c.b16 %v219, %v217
    %v244 = vpack.c.b16 %v220, %v218
    %v245 = vpack.c.b16 %v223, %v221
    %v246 = vpack.c.b16 %v224, %v222
    %v247 = vpack.c.b16 %v227, %v225
    %v248 = vpack.c.b16 %v228, %v226
    %v249 = vpack.c.b16 %v231, %v229
    %v250 = vpack.c.b16 %v232, %v230
    %v251 = vpack.c.b16 %v235, %v233
    %v252 = vpack.c.b16 %v236, %v234
    %269 = vmatprep.subr.bf16.mxu0 %v238
    %270 = vmatpush1.bf16.msra.mxu0 %v237
    %271 = vmatprep.subr.bf16.mxu0 %v240
    %272 = vmatpush1.bf16.msra.mxu0 %v239
    %273 = vmatprep.subr.bf16.mxu0 %v242
    %274 = vmatpush1.bf16.msra.mxu0 %v241
    %275 = vmatprep.subr.bf16.mxu0 %v244
    %276 = vmatpush1.bf16.msra.mxu0 %v243
    %277 = vmatprep.subr.bf16.mxu0 %v246
    %278 = vmatpush1.bf16.msra.mxu0 %v245
    %279 = vmatprep.subr.bf16.mxu0 %v248
    %280 = vmatpush1.bf16.msra.mxu0 %v247
    %281 = vmatprep.subr.bf16.mxu0 %v250
    %282 = vmatpush1.bf16.msra.mxu0 %v249
    %283 = vmatprep.subr.bf16.mxu0 %v252
    %284 = vmatpush1.bf16.msra.mxu0 %v251
    %285 = vmatprep.subr.bf16.mxu0 0
    %286 = vmatpush1.bf16.msra.mxu0 0
    %287 = vmatprep.subr.bf16.mxu0 0
    %288 = vmatpush1.bf16.msra.mxu0 0
    %289 = vmatprep.subr.bf16.mxu0 0
    %290 = vmatpush1.bf16.msra.mxu0 0
    %291 = vmatprep.subr.bf16.mxu0 0
    %292 = vmatpush1.bf16.msra.mxu0 0
    %293 = vmatprep.subr.bf16.mxu0 0
    %294 = vmatpush1.bf16.msra.mxu0 0
    %295 = vmatprep.subr.bf16.mxu0 0
    %296 = vmatpush1.bf16.msra.mxu0 0
    %297 = vmatprep.subr.bf16.mxu0 0
    %298 = vmatpush1.bf16.msra.mxu0 0
    %299 = vmatprep.subr.bf16.mxu0 0
    %300 = vmatpush1.bf16.msra.mxu0 0
    %301 = vmatprep.mubr.bf16.mxu0 0
    %302 = vmatmul.mubr.bf16.gmra.mrb[0].mxu0 %v173
    %v303 = vpop.f32.mrb[0].mxu0
    %v304 = vadd.f32 0.0, %v303
    %v305 = vpop.f32.mrb[0].mxu0
    %v306 = vadd.f32 0.0, %v305
    %v307 = vpop.f32.mrb[0].mxu0
    %v308 = vadd.f32 0.0, %v307
    %v309 = vpop.f32.mrb[0].mxu0
    %v310 = vadd.f32 0.0, %v309
    %311 = vmatprep.mubr.bf16.mxu0 0
    %312 = vmatmul.mubr.bf16.gmra.mrb[0].mxu0 %v174
    %v313 = vpop.f32.mrb[0].mxu0
    %v314 = vadd.f32 0.0, %v313
    %v315 = vpop.f32.mrb[0].mxu0
    %v316 = vadd.f32 0.0, %v315
    %v317 = vpop.f32.mrb[0].mxu0
    %v318 = vadd.f32 0.0, %v317
    %v319 = vpop.f32.mrb[0].mxu0
    %v320 = vadd.f32 0.0, %v319
    %321 = vmatprep.mubr.bf16.mxu0 0
    %322 = vmatmul.mubr.bf16.gmra.mrb[0].mxu0 %v175
    %v323 = vpop.f32.mrb[0].mxu0
    %v324 = vadd.f32 0.0, %v323
    %v325 = vpop.f32.mrb[0].mxu0
    %v326 = vadd.f32 0.0, %v325
    %v327 = vpop.f32.mrb[0].mxu0
    %v328 = vadd.f32 0.0, %v327
    %v329 = vpop.f32.mrb[0].mxu0
    %v330 = vadd.f32 0.0, %v329
    %331 = vmatprep.mubr.bf16.mxu0 0
    %332 = vmatmul.mubr.bf16.gmra.mrb[0].mxu0 %v176
    %v333 = vpop.f32.mrb[0].mxu0
    %v334 = vadd.f32 0.0, %v333
    %v335 = vpop.f32.mrb[0].mxu0
    %v336 = vadd.f32 0.0, %v335
    %v337 = vpop.f32.mrb[0].mxu0
    %v338 = vadd.f32 0.0, %v337
    %v339 = vpop.f32.mrb[0].mxu0
    %v340 = vadd.f32 0.0, %v339
    %341 = vmatprep.mubr.bf16.mxu0 0
    %342 = vmatmul.mubr.bf16.gmra.mrb[0].mxu0 %v177
    %v343 = vpop.f32.mrb[0].mxu0
    %v344 = vadd.f32 0.0, %v343
    %v345 = vpop.f32.mrb[0].mxu0
    %v346 = vadd.f32 0.0, %v345
    %v347 = vpop.f32.mrb[0].mxu0
    %v348 = vadd.f32 0.0, %v347
    %v349 = vpop.f32.mrb[0].mxu0
    %v350 = vadd.f32 0.0, %v349
    %351 = vmatprep.mubr.bf16.mxu0 0
    %352 = vmatmul.mubr.bf16.gmra.mrb[0].mxu0 %v178
    %v353 = vpop.f32.mrb[0].mxu0
    %v354 = vadd.f32 0.0, %v353
    %v355 = vpop.f32.mrb[0].mxu0
    %v356 = vadd.f32 0.0, %v355
    %v357 = vpop.f32.mrb[0].mxu0
    %v358 = vadd.f32 0.0, %v357
    %v359 = vpop.f32.mrb[0].mxu0
    %v360 = vadd.f32 0.0, %v359
    %361 = vmatprep.mubr.bf16.mxu0 0
    %362 = vmatmul.mubr.bf16.gmra.mrb[0].mxu0 %v179
    %v363 = vpop.f32.mrb[0].mxu0
    %v364 = vadd.f32 0.0, %v363
    %v365 = vpop.f32.mrb[0].mxu0
    %v366 = vadd.f32 0.0, %v365
    %v367 = vpop.f32.mrb[0].mxu0
    %v368 = vadd.f32 0.0, %v367
    %v369 = vpop.f32.mrb[0].mxu0
    %v370 = vadd.f32 0.0, %v369
    %371 = vmatprep.mubr.bf16.mxu0 0
    %372 = vmatmul.mubr.bf16.gmra.mrb[0].mxu0 %v180
    %v373 = vpop.f32.mrb[0].mxu0
    %v374 = vadd.f32 0.0, %v373
    %v375 = vpop.f32.mrb[0].mxu0
    %v376 = vadd.f32 0.0, %v375
    %v377 = vpop.f32.mrb[0].mxu0
    %v378 = vadd.f32 0.0, %v377
    %v379 = vpop.f32.mrb[0].mxu0
    %v380 = vadd.f32 0.0, %v379
    %381 = vdwg.mxu0
    %v382 = vadd.f32 %v77, %v304
    %v383 = vadd.f32 %v78, %v306
    %v384 = vadd.f32 %v79, %v308
    %v385 = vadd.f32 %v80, %v310
    %v386 = vadd.f32 %v81, %v314
    %v387 = vadd.f32 %v82, %v316
    %v388 = vadd.f32 %v83, %v318
    %v389 = vadd.f32 %v84, %v320
    %v390 = vadd.f32 %v85, %v324
    %v391 = vadd.f32 %v86, %v326
    %v392 = vadd.f32 %v87, %v328
    %v393 = vadd.f32 %v88, %v330
    %v394 = vadd.f32 %v89, %v334
    %v395 = vadd.f32 %v90, %v336
    %v396 = vadd.f32 %v91, %v338
    %v397 = vadd.f32 %v92, %v340
    %v398 = vadd.f32 %v93, %v344
    %v399 = vadd.f32 %v94, %v346
    %v400 = vadd.f32 %v95, %v348
    %v401 = vadd.f32 %v96, %v350
    %v402 = vadd.f32 %v97, %v354
    %v403 = vadd.f32 %v98, %v356
    %v404 = vadd.f32 %v99, %v358
    %v405 = vadd.f32 %v100, %v360
    %v406 = vadd.f32 %v101, %v364
    %v407 = vadd.f32 %v102, %v366
    %v408 = vadd.f32 %v103, %v368
    %v409 = vadd.f32 %v104, %v370
    %v410 = vadd.f32 %v105, %v374
    %v411 = vadd.f32 %v106, %v376
    %v412 = vadd.f32 %v107, %v378
    %v413 = vadd.f32 %v108, %v380
    %414 = vst [vmem:[#allocation2] sm:$0xff] %v382
    %415 = vst [vmem:[#allocation2 + $0x8] sm:$0xff] %v383
    %416 = vst [vmem:[#allocation2 + $0x10] sm:$0xff] %v384
    %417 = vst [vmem:[#allocation2 + $0x18] sm:$0xff] %v385
    %418 = vst [vmem:[#allocation2 + $0x20] sm:$0xff] %v386
    %419 = vst [vmem:[#allocation2 + $0x28] sm:$0xff] %v387
    %420 = vst [vmem:[#allocation2 + $0x30] sm:$0xff] %v388
    %421 = vst [vmem:[#allocation2 + $0x38] sm:$0xff] %v389
    %422 = vst [vmem:[#allocation2 + $0x40] sm:$0xff] %v390
    %423 = vst [vmem:[#allocation2 + $0x48] sm:$0xff] %v391
    %424 = vst [vmem:[#allocation2 + $0x50] sm:$0xff] %v392
    %425 = vst [vmem:[#allocation2 + $0x58] sm:$0xff] %v393
    %426 = vst [vmem:[#allocation2 + $0x60] sm:$0xff] %v394
    %427 = vst [vmem:[#allocation2 + $0x68] sm:$0xff] %v395
    %428 = vst [vmem:[#allocation2 + $0x70] sm:$0xff] %v396
    %429 = vst [vmem:[#allocation2 + $0x78] sm:$0xff] %v397
    %430 = vst [vmem:[#allocation2 + $0x80] sm:$0xff] %v398
    %431 = vst [vmem:[#allocation2 + $0x88] sm:$0xff] %v399
    %432 = vst [vmem:[#allocation2 + $0x90] sm:$0xff] %v400
    %433 = vst [vmem:[#allocation2 + $0x98] sm:$0xff] %v401
    %434 = vst [vmem:[#allocation2 + $0xa0] sm:$0xff] %v402
    %435 = vst [vmem:[#allocation2 + $0xa8] sm:$0xff] %v403
    %436 = vst [vmem:[#allocation2 + $0xb0] sm:$0xff] %v404
    %437 = vst [vmem:[#allocation2 + $0xb8] sm:$0xff] %v405
    %438 = vst [vmem:[#allocation2 + $0xc0] sm:$0xff] %v406
    %439 = vst [vmem:[#allocation2 + $0xc8] sm:$0xff] %v407
    %440 = vst [vmem:[#allocation2 + $0xd0] sm:$0xff] %v408
    %441 = vst [vmem:[#allocation2 + $0xd8] sm:$0xff] %v409
    %442 = vst [vmem:[#allocation2 + $0xe0] sm:$0xff] %v410
    %443 = vst [vmem:[#allocation2 + $0xe8] sm:$0xff] %v411
    %444 = vst [vmem:[#allocation2 + $0xf0] sm:$0xff] %v412
    %445 = vst [vmem:[#allocation2 + $0xf8] sm:$0xff] %v413
    // Predicated region
    $region22: #{tpu_custom_call.1} parent=1 // pred_check
      %p446 = pneg %p41
    $region23: #{tpu_custom_call.1} parent=1 // pred_check_branch
      %448 = sbr.rel (%p446) target = $region25
    $region24: #{tpu_custom_call.1} parent=1 // pred_region
      %v449 = vld [vmem:[#allocation2] sm:$0xff]
      %v450 = vld [vmem:[#allocation2 + $0x8] sm:$0xff]
      %v451 = vld [vmem:[#allocation2 + $0x10] sm:$0xff]
      %v452 = vld [vmem:[#allocation2 + $0x18] sm:$0xff]
      %v453 = vld [vmem:[#allocation2 + $0x20] sm:$0xff]
      %v454 = vld [vmem:[#allocation2 + $0x28] sm:$0xff]
      %v455 = vld [vmem:[#allocation2 + $0x30] sm:$0xff]
      %v456 = vld [vmem:[#allocation2 + $0x38] sm:$0xff]
      %v457 = vld [vmem:[#allocation2 + $0x40] sm:$0xff]
      %v458 = vld [vmem:[#allocation2 + $0x48] sm:$0xff]
      %v459 = vld [vmem:[#allocation2 + $0x50] sm:$0xff]
      %v460 = vld [vmem:[#allocation2 + $0x58] sm:$0xff]
      %v461 = vld [vmem:[#allocation2 + $0x60] sm:$0xff]
      %v462 = vld [vmem:[#allocation2 + $0x68] sm:$0xff]
      %v463 = vld [vmem:[#allocation2 + $0x70] sm:$0xff]
      %v464 = vld [vmem:[#allocation2 + $0x78] sm:$0xff]
      %v465 = vld [vmem:[#allocation2 + $0x80] sm:$0xff]
      %v466 = vld [vmem:[#allocation2 + $0x88] sm:$0xff]
      %v467 = vld [vmem:[#allocation2 + $0x90] sm:$0xff]
      %v468 = vld [vmem:[#allocation2 + $0x98] sm:$0xff]
      %v469 = vld [vmem:[#allocation2 + $0xa0] sm:$0xff]
      %v470 = vld [vmem:[#allocation2 + $0xa8] sm:$0xff]
      %v471 = vld [vmem:[#allocation2 + $0xb0] sm:$0xff]
      %v472 = vld [vmem:[#allocation2 + $0xb8] sm:$0xff]
      %v473 = vld [vmem:[#allocation2 + $0xc0] sm:$0xff]
      %v474 = vld [vmem:[#allocation2 + $0xc8] sm:$0xff]
      %v475 = vld [vmem:[#allocation2 + $0xd0] sm:$0xff]
      %v476 = vld [vmem:[#allocation2 + $0xd8] sm:$0xff]
      %v477 = vld [vmem:[#allocation2 + $0xe0] sm:$0xff]
      %v478 = vld [vmem:[#allocation2 + $0xe8] sm:$0xff]
      %v479 = vld [vmem:[#allocation2 + $0xf0] sm:$0xff]
      %v480 = vld [vmem:[#allocation2 + $0xf8] sm:$0xff]
      %v481 = vpack.c.bf16 %v451, %v449
      %v482 = vpack.c.bf16 %v452, %v450
      %v483 = vpack.c.bf16 %v455, %v453
      %v484 = vpack.c.bf16 %v456, %v454
      %v485 = vpack.c.bf16 %v459, %v457
      %v486 = vpack.c.bf16 %v460, %v458
      %v487 = vpack.c.bf16 %v463, %v461
      %v488 = vpack.c.bf16 %v464, %v462
      %v489 = vpack.c.bf16 %v467, %v465
      %v490 = vpack.c.bf16 %v468, %v466
      %v491 = vpack.c.bf16 %v471, %v469
      %v492 = vpack.c.bf16 %v472, %v470
      %v493 = vpack.c.bf16 %v475, %v473
      %v494 = vpack.c.bf16 %v476, %v474
      %v495 = vpack.c.bf16 %v479, %v477
      %v496 = vpack.c.bf16 %v480, %v478
      %v513 = vunpack.c.l.b16 %v481
      %v514 = vunpack.c.l.b16 %v482
      %v515 = vunpack.c.h.b16 %v481
      %v516 = vunpack.c.h.b16 %v482
      %v517 = vunpack.c.l.b16 %v483
      %v518 = vunpack.c.l.b16 %v484
      %v519 = vunpack.c.h.b16 %v483
      %v520 = vunpack.c.h.b16 %v484
      %v521 = vunpack.c.l.b16 %v485
      %v522 = vunpack.c.l.b16 %v486
      %v523 = vunpack.c.h.b16 %v485
      %v524 = vunpack.c.h.b16 %v486
      %v525 = vunpack.c.l.b16 %v487
      %v526 = vunpack.c.l.b16 %v488
      %v527 = vunpack.c.h.b16 %v487
      %v528 = vunpack.c.h.b16 %v488
      %v529 = vunpack.c.l.b16 %v489
      %v530 = vunpack.c.l.b16 %v490
      %v531 = vunpack.c.h.b16 %v489
      %v532 = vunpack.c.h.b16 %v490
      %v533 = vunpack.c.l.b16 %v491
      %v534 = vunpack.c.l.b16 %v492
      %v535 = vunpack.c.h.b16 %v491
      %v536 = vunpack.c.h.b16 %v492
      %v537 = vunpack.c.l.b16 %v493
      %v538 = vunpack.c.l.b16 %v494
      %v539 = vunpack.c.h.b16 %v493
      %v540 = vunpack.c.h.b16 %v494
      %v541 = vunpack.c.l.b16 %v495
      %v542 = vunpack.c.l.b16 %v496
      %v543 = vunpack.c.h.b16 %v495
      %v544 = vunpack.c.h.b16 %v496
      %v545 = vpack.c.b16 %v514, %v513
      %v546 = vpack.c.b16 %v516, %v515
      %v547 = vpack.c.b16 %v518, %v517
      %v548 = vpack.c.b16 %v520, %v519
      %v549 = vpack.c.b16 %v522, %v521
      %v550 = vpack.c.b16 %v524, %v523
      %v551 = vpack.c.b16 %v526, %v525
      %v552 = vpack.c.b16 %v528, %v527
      %v553 = vpack.c.b16 %v530, %v529
      %v554 = vpack.c.b16 %v532, %v531
      %v555 = vpack.c.b16 %v534, %v533
      %v556 = vpack.c.b16 %v536, %v535
      %v557 = vpack.c.b16 %v538, %v537
      %v558 = vpack.c.b16 %v540, %v539
      %v559 = vpack.c.b16 %v542, %v541
      %v560 = vpack.c.b16 %v544, %v543
      %577 = vst [vmem:[#allocation8] sm:$0xff] %v545
      %578 = vst [vmem:[#allocation8 + $0x8] sm:$0xff] %v546
      %579 = vst [vmem:[#allocation8 + $0x10] sm:$0xff] %v547
      %580 = vst [vmem:[#allocation8 + $0x18] sm:$0xff] %v548
      %581 = vst [vmem:[#allocation8 + $0x20] sm:$0xff] %v549
      %582 = vst [vmem:[#allocation8 + $0x28] sm:$0xff] %v550
      %583 = vst [vmem:[#allocation8 + $0x30] sm:$0xff] %v551
      %584 = vst [vmem:[#allocation8 + $0x38] sm:$0xff] %v552
      %585 = vst [vmem:[#allocation8 + $0x40] sm:$0xff] %v553
      %586 = vst [vmem:[#allocation8 + $0x48] sm:$0xff] %v554
      %587 = vst [vmem:[#allocation8 + $0x50] sm:$0xff] %v555
      %588 = vst [vmem:[#allocation8 + $0x58] sm:$0xff] %v556
      %589 = vst [vmem:[#allocation8 + $0x60] sm:$0xff] %v557
      %590 = vst [vmem:[#allocation8 + $0x68] sm:$0xff] %v558
      %591 = vst [vmem:[#allocation8 + $0x70] sm:$0xff] %v559
      %592 = vst [vmem:[#allocation8 + $0x78] sm:$0xff] %v560
    $region25: #{tpu_custom_call.1} parent=1 // pred_fallthru
      _
    // Predicated region
    $region26: #{tpu_custom_call.1} parent=1 // pred_check
      _
    $region27: #{tpu_custom_call.1} parent=1 // pred_check_branch
      %594 = sbr.rel (0) target = $region29
    $region28: #{tpu_custom_call.1} parent=1 // pred_region
      %s596 = ssub.s32 2048, 2048
      %597 = vsyncadd [#allocation5], %s596
      %s598 = sshll.u32 [#allocation8], 4
      %s599 = int_to_ptr.vmem [resolvable:$true] %s598
      %604 = dma.vmem_to_hbm [thread:$0]  %s599, 2048, %s2, [#allocation5], 128, 128, 8
    $region29: #{tpu_custom_call.1} parent=1 // pred_fallthru
      _
    // Predicated region
    $region30: #{tpu_custom_call.1} parent=1 // pred_check
      _
    $region31: #{tpu_custom_call.1} parent=1 // pred_check_branch
      %606 = sbr.rel (0) target = $region33
    $region32: #{tpu_custom_call.1} parent=1 // pred_region
      %607 = dma.done [#allocation5], 2048
    $region33: #{tpu_custom_call.1} parent=1 // pred_fallthru
      _
    %608 = vsyncpa [#allocation4], 1
    %609 = vsyncpa [#allocation7], 1
    %610 = vsyncpa [#allocation5], 1

</llo_original>
